<compile_context>
chip_gen: v7x
topology: tpu7x:2x2x1
jax: 0.10.0
libtpu: 0.0.40
codegen_flags: <defaults>
</compile_context>

<pallas_src>
import jax
import jax.numpy as jnp
from jax.experimental import pallas as pl
from jax.experimental.pallas import tpu as pltpu


# ----------------------------- config -----------------------------
class Cfg:
    HIDDEN_SIZE = 32
    FLAT_MLP_SIZE = 32
    FLAT_GLIMPSES = 1
    FLAT_OUT_SIZE = 64
    DROPOUT_R = 0.1          # inference: dropout is identity


# ----------------------------- fused Pallas kernel -----------------------------
def _attflat_kernel(x_ref, mask_ref, wfc_ref, bfc_ref, wlin_ref, blin_ref,
                    wmg_ref, bmg_ref, o_ref):
    x = x_ref[...]                                   # [B, S, H] f32
    B, S, H = x.shape
    x2 = x.reshape(B * S, H)

    # --- MLP: Linear(H->M) + ReLU (+ dropout == identity) + Linear(M->G) ---
    hmid = jnp.dot(x2, wfc_ref[...], preferred_element_type=jnp.float32)
    hmid = jnp.maximum(hmid + bfc_ref[...], 0.0)                  # [B*S, M]
    att = jnp.dot(hmid, wlin_ref[...], preferred_element_type=jnp.float32)
    att = att + blin_ref[...]                                     # [B*S, G]
    G = att.shape[-1]
    att = att.reshape(B, S, G)

    # --- masked softmax over the sequence axis (dim=1) ---
    mask = mask_ref[...]                             # [B, S] float, 1.0 == masked
    att = jnp.where(mask[:, :, None] > 0.5, jnp.float32(-1e9), att)
    att = att - jnp.max(att, axis=1, keepdims=True)  # numerically stable
    p = jnp.exp(att)
    denom = jnp.sum(p, axis=1, keepdims=True)
    p = p * pl.reciprocal(denom, approx=True)        # EUP slot, otherwise idle

    # --- glimpse pooling as one batched matmul on the MXU ---
    pooled = jnp.einsum('bsg,bsh->bgh', p, x,
                        preferred_element_type=jnp.float32)       # [B, G, H]
    pooled = pooled.reshape(B, G * H)

    # --- merge linear ---
    out = jnp.dot(pooled, wmg_ref[...], preferred_element_type=jnp.float32)
    o_ref[...] = out + bmg_ref[...]


_VMEM = pl.BlockSpec(memory_space=pltpu.MemorySpace.VMEM)


def attflat_forward(params, x, x_mask):
    """x: [B, S, H] float32; x_mask: [B, 1, 1, S] bool (True == padded)."""
    B, S, H = x.shape
    out_size = params['w_merge'].shape[1]
    mask_f = x_mask[:, 0, 0, :].astype(jnp.float32)               # [B, S]
    return pl.pallas_call(
        _attflat_kernel,
        out_shape=jax.ShapeDtypeStruct((B, out_size), jnp.float32),
        in_specs=[_VMEM] * 8,
        out_specs=_VMEM,
    )(x.astype(jnp.float32), mask_f,
      params['w_fc'], params['b_fc'],
      params['w_lin'], params['b_lin'],
      params['w_merge'], params['b_merge'])


# ----------------------------- pure-JAX reference -----------------------------
def attflat_reference(params, x, x_mask):
    h = jnp.maximum(x @ params['w_fc'] + params['b_fc'], 0.0)
    att = h @ params['w_lin'] + params['b_lin']                   # [B, S, G]
    m = x_mask[:, 0, 0, :, None]                                  # [B, S, 1] bool
    att = jnp.where(m, jnp.float32(-1e9), att)
    att = jax.nn.softmax(att, axis=1)
    pooled = jnp.einsum('bsg,bsh->bgh', att, x).reshape(x.shape[0], -1)
    return pooled @ params['w_merge'] + params['b_merge']


# ----------------------------- parameter init -----------------------------
def init_params(key, cfg):
    ks = jax.random.split(key, 6)
    H, M, G, OUT = (cfg.HIDDEN_SIZE, cfg.FLAT_MLP_SIZE,
                    cfg.FLAT_GLIMPSES, cfg.FLAT_OUT_SIZE)
    return {
        'w_fc': jax.random.normal(ks[0], (H, M), jnp.float32) * 0.05,
        'b_fc': jax.random.normal(ks[1], (1, M), jnp.float32) * 0.01,
        'w_lin': jax.random.normal(ks[2], (M, G), jnp.float32) * 0.05,
        'b_lin': jax.random.normal(ks[3], (1, G), jnp.float32) * 0.01,
        'w_merge': jax.random.normal(ks[4], (H * G, OUT), jnp.float32) * 0.05,
        'b_merge': jax.random.normal(ks[5], (1, OUT), jnp.float32) * 0.01,
    }


# ----------------------------- main -----------------------------
if __name__ == "__main__":
    cfg = Cfg()
    B, S = 2, 8

    key = jax.random.PRNGKey(0)
    kp, kx = jax.random.split(key)
    params = init_params(kp, cfg)

    x = jax.random.normal(kx, (B, S, cfg.HIDDEN_SIZE), jnp.float32)
    # padding mask: True == padded position (like make_mask on padded features)
    lengths = jnp.array([5, 7], dtype=jnp.int32)
    pos = jnp.arange(S, dtype=jnp.int32)[None, :]
    x_mask = (pos >= lengths[:, None])[:, None, None, :]          # [B,1,1,S] bool

    fwd = jax.jit(attflat_forward)
    out = jax.block_until_ready(fwd(params, x, x_mask))

    assert out.shape == (B, cfg.FLAT_OUT_SIZE)
    assert bool(jnp.all(jnp.isfinite(out)))

    ref = attflat_reference(params, x, x_mask)
    assert bool(jnp.allclose(out, ref, rtol=1e-2, atol=1e-2)), (
        "mismatch vs reference: max abs err "
        f"{float(jnp.max(jnp.abs(out - ref)))}")

    print("KERNEL_OK")
</pallas_src>

<mosaic_0001>
module attributes {stable_mosaic.version = 11 : i64} {
  func.func @_attflat_kernel(%arg0: memref<2x8x32xf32, #tpu.memory_space<vmem>>, %arg1: memref<2x8xf32, #tpu.memory_space<vmem>>, %arg2: memref<32x32xf32, #tpu.memory_space<vmem>>, %arg3: memref<1x32xf32, #tpu.memory_space<vmem>>, %arg4: memref<32x1xf32, #tpu.memory_space<vmem>>, %arg5: memref<1x1xf32, #tpu.memory_space<vmem>>, %arg6: memref<32x64xf32, #tpu.memory_space<vmem>>, %arg7: memref<1x64xf32, #tpu.memory_space<vmem>>, %arg8: memref<2x64xf32, #tpu.memory_space<vmem>>) attributes {dimension_semantics = [], scalar_prefetch = 0 : i64, scratch_operands = 0 : i64, tpu.core_type = #tpu.core_type<tc>} {
    %c0 = arith.constant 0 : index
    %c0_0 = arith.constant 0 : index
    %c0_1 = arith.constant 0 : index
    %0 = vector.load %arg0[%c0, %c0_0, %c0_1] : memref<2x8x32xf32, #tpu.memory_space<vmem>>, vector<2x8x32xf32>
    %1 = vector.shape_cast %0 : vector<2x8x32xf32> to vector<16x32xf32>
    %c0_2 = arith.constant 0 : index
    %c0_3 = arith.constant 0 : index
    %2 = vector.load %arg2[%c0_2, %c0_3] : memref<32x32xf32, #tpu.memory_space<vmem>>, vector<32x32xf32>
    %cst = arith.constant dense<0.000000e+00> : vector<16x32xf32>
    %3 = tpu.matmul %1, %2, %cst {dimension_numbers = #tpu.dot_dimension_numbers<[1], [0], [0], [1], [0, 0, 1, 1], [], []>} : vector<16x32xf32>, vector<32x32xf32>, vector<16x32xf32> -> vector<16x32xf32>
    %c0_4 = arith.constant 0 : index
    %c0_5 = arith.constant 0 : index
    %4 = vector.load %arg3[%c0_4, %c0_5] : memref<1x32xf32, #tpu.memory_space<vmem>>, vector<1x32xf32>
    %5 = vector.broadcast %4 : vector<1x32xf32> to vector<16x32xf32>
    %6 = arith.addf %3, %5 : vector<16x32xf32>
    %cst_6 = arith.constant 0.000000e+00 : f32
    %7 = vector.broadcast %cst_6 : f32 to vector<16x32xf32>
    %8 = arith.maximumf %6, %7 : vector<16x32xf32>
    %c0_7 = arith.constant 0 : index
    %c0_8 = arith.constant 0 : index
    %9 = vector.load %arg4[%c0_7, %c0_8] : memref<32x1xf32, #tpu.memory_space<vmem>>, vector<32x1xf32>
    %cst_9 = arith.constant dense<0.000000e+00> : vector<16x1xf32>
    %10 = tpu.matmul %8, %9, %cst_9 {dimension_numbers = #tpu.dot_dimension_numbers<[1], [0], [0], [1], [0, 0, 1, 1], [], []>} : vector<16x32xf32>, vector<32x1xf32>, vector<16x1xf32> -> vector<16x1xf32>
    %c0_10 = arith.constant 0 : index
    %c0_11 = arith.constant 0 : index
    %11 = vector.load %arg5[%c0_10, %c0_11] : memref<1x1xf32, #tpu.memory_space<vmem>>, vector<1x1xf32>
    %12 = vector.broadcast %11 : vector<1x1xf32> to vector<16x1xf32>
    %13 = arith.addf %10, %12 : vector<16x1xf32>
    %14 = vector.shape_cast %13 : vector<16x1xf32> to vector<2x8x1xf32>
    %c0_12 = arith.constant 0 : index
    %c0_13 = arith.constant 0 : index
    %15 = vector.load %arg1[%c0_12, %c0_13] : memref<2x8xf32, #tpu.memory_space<vmem>>, vector<2x8xf32>
    %16 = vector.shape_cast %15 : vector<2x8xf32> to vector<2x8x1xf32>
    %cst_14 = arith.constant 5.000000e-01 : f32
    %17 = vector.broadcast %cst_14 : f32 to vector<2x8x1xf32>
    %18 = arith.cmpf ogt, %16, %17 : vector<2x8x1xf32>
    %cst_15 = arith.constant -1.000000e+09 : f32
    %19 = vector.broadcast %cst_15 : f32 to vector<2x8x1xf32>
    %20 = arith.select %18, %19, %14 : vector<2x8x1xi1>, vector<2x8x1xf32>
    %cst_16 = arith.constant dense<0xFF800000> : vector<2x1xf32>
    %21 = vector.multi_reduction <maximumf>, %20, %cst_16 [1] : vector<2x8x1xf32> to vector<2x1xf32>
    %22 = vector.shape_cast %21 : vector<2x1xf32> to vector<2x1x1xf32>
    %23 = vector.broadcast %22 : vector<2x1x1xf32> to vector<2x8x1xf32>
    %24 = arith.subf %20, %23 : vector<2x8x1xf32>
    %25 = math.exp %24 : vector<2x8x1xf32>
    %cst_17 = arith.constant dense<0.000000e+00> : vector<2x1xf32>
    %26 = vector.multi_reduction <add>, %25, %cst_17 [1] : vector<2x8x1xf32> to vector<2x1xf32>
    %27 = vector.shape_cast %26 : vector<2x1xf32> to vector<2x1x1xf32>
    %28 = tpu.reciprocal %27 {approx = true} : vector<2x1x1xf32> -> vector<2x1x1xf32>
    %29 = vector.broadcast %28 : vector<2x1x1xf32> to vector<2x8x1xf32>
    %30 = arith.mulf %25, %29 : vector<2x8x1xf32>
    "tpu.trace_start"() <{level = 10 : i32, message = "bsg,bsh->bgh"}> : () -> ()
    %cst_18 = arith.constant dense<0.000000e+00> : vector<2x1x32xf32>
    %31 = tpu.matmul %30, %0, %cst_18 {dimension_numbers = #tpu.dot_dimension_numbers<[1], [1], [2], [2], [0, 0, 0, 2, 1, 2], [0], [0]>} : vector<2x8x1xf32>, vector<2x8x32xf32>, vector<2x1x32xf32> -> vector<2x1x32xf32>
    "tpu.trace_stop"() : () -> ()
    %32 = vector.shape_cast %31 : vector<2x1x32xf32> to vector<2x32xf32>
    %c0_19 = arith.constant 0 : index
    %c0_20 = arith.constant 0 : index
    %33 = vector.load %arg6[%c0_19, %c0_20] : memref<32x64xf32, #tpu.memory_space<vmem>>, vector<32x64xf32>
    %cst_21 = arith.constant dense<0.000000e+00> : vector<2x64xf32>
    %34 = tpu.matmul %32, %33, %cst_21 {dimension_numbers = #tpu.dot_dimension_numbers<[1], [0], [0], [1], [0, 0, 1, 1], [], []>} : vector<2x32xf32>, vector<32x64xf32>, vector<2x64xf32> -> vector<2x64xf32>
    %c0_22 = arith.constant 0 : index
    %c0_23 = arith.constant 0 : index
    %35 = vector.load %arg7[%c0_22, %c0_23] : memref<1x64xf32, #tpu.memory_space<vmem>>, vector<1x64xf32>
    %36 = vector.broadcast %35 : vector<1x64xf32> to vector<2x64xf32>
    %37 = arith.addf %34, %36 : vector<2x64xf32>
    %c0_24 = arith.constant 0 : index
    %c0_25 = arith.constant 0 : index
    %38 = vector.load %arg8[%c0_24, %c0_25] : memref<2x64xf32, #tpu.memory_space<vmem>>, vector<2x64xf32>
    tpu.vector_store %arg8[%c0_24, %c0_25], %37 {strides = array<i32>} : memref<2x64xf32, #tpu.memory_space<vmem>>, vector<2x64xf32>,
    return
  }
}

</mosaic_0001>

<llo_original>
// kernel: attflat_forward.1
$region0: #{attflat_forward.1}
  #allocation0 [shape = 'u32[]', space=smem, size = 0x4, offset = 0x4, fixed_abs, tag = 'smem constant byte address 0x4 - core index']
  #allocation1 [shape = 'u32[144,128]{1,0:T(1,128)}', space=vmem, size = 0x12000, scoped, tag = 'internal scratch']
  #allocation2 [shape = 'f32[1,1]{1,0:T(1,128)S(1)}', space=vmem, size = 0x200, scoped, tag = 'scoped memory for attflat_forward.1']
  %s0 = inlined_call_operand.vmem [shape: f32[2,8,32], index: 0, kind: input, shape index: {}]
  %s1 = inlined_call_operand.vmem [shape: f32[2,8], index: 1, kind: input, shape index: {}]
  %s2 = inlined_call_operand.vmem [shape: f32[32,32], index: 2, kind: input, shape index: {}]
  %s3 = inlined_call_operand.hbm [shape: f32[1,32], index: 3, kind: input, shape index: {}]
  %s4 = inlined_call_operand.vmem [shape: f32[32,1], index: 4, kind: input, shape index: {}]
  %s5 = inlined_call_operand.<no memory space> [shape: f32[1,1], index: 5, kind: input, shape index: {}]
  %s6 = inlined_call_operand.hbm [shape: f32[32,64], index: 6, kind: input, shape index: {}]
  %s7 = inlined_call_operand.hbm [shape: f32[1,64], index: 7, kind: input, shape index: {}]
  %s8 = inlined_call_operand.hbm [shape: f32[2,64], index: 8, kind: output, shape index: {}]
  %s9 = sld [smem:[#allocation0]]
  $region54: #{attflat_forward.1} parent=0
    _
  %s11 = ssub.s32 1, %s9
  %s12 = scalar_select 0, %s11, %s9
  %v13 = vstv %s5
  %14 = vst [vmem:[#allocation2] sm:$0x1] %v13
  $region1: #{attflat_forward.1} parent=0
    #allocation3 [shape = 'u8[512]{0}', space=vmem, size = 0x400, scoped, tag = 'input window, operand 3, single buffered']
    #allocation4 [shape = 's32[1]{0}', space=sflag, size = 0x4, scoped, tag = 'scoped memory for attflat_forward.1']
    #allocation5 [shape = 's32[1]{0}', space=sflag, size = 0x4, scoped, tag = 'scoped memory for attflat_forward.1']
    #allocation6 [shape = 'u8[16384]{0}', space=vmem, size = 0x4000, scoped, tag = 'input window, operand 6, single buffered']
    #allocation7 [shape = 's32[1]{0}', space=sflag, size = 0x4, scoped, tag = 'scoped memory for attflat_forward.1']
    #allocation8 [shape = 'u8[512]{0}', space=vmem, size = 0x400, scoped, tag = 'input window, operand 7, single buffered']
    #allocation9 [shape = 'u8[1024]{0}', space=vmem, size = 0x400, scoped, tag = 'output window, operand 0, single buffered']
    %15 = vsyncpa [#allocation4], 0
    %16 = vsyncpa [#allocation7], 0
    %17 = vsyncpa [#allocation5], 0
    // Predicated region
    $region2: #{attflat_forward.1} parent=1 // pred_check
      _
    $region3: #{attflat_forward.1} parent=1 // pred_check_branch
      %19 = sbr.rel (0) target = $region5
    $region4: #{attflat_forward.1} parent=1 // pred_region
      _
    $region5: #{attflat_forward.1} parent=1 // pred_fallthru
      _
    // Predicated region
    $region6: #{attflat_forward.1} parent=1 // pred_check
      _
    $region7: #{attflat_forward.1} parent=1 // pred_check_branch
      %21 = sbr.rel (0) target = $region9
    $region8: #{attflat_forward.1} parent=1 // pred_region
      _
    $region9: #{attflat_forward.1} parent=1 // pred_fallthru
      _
    // Predicated region
    $region10: #{attflat_forward.1} parent=1 // pred_check
      _
    $region11: #{attflat_forward.1} parent=1 // pred_check_branch
      %23 = sbr.rel (0) target = $region13
    $region12: #{attflat_forward.1} parent=1 // pred_region
      _
    $region13: #{attflat_forward.1} parent=1 // pred_fallthru
      _
    // Predicated region
    $region14: #{attflat_forward.1} parent=1 // pred_check
      _
    $region15: #{attflat_forward.1} parent=1 // pred_check_branch
      %25 = sbr.rel (0) target = $region17
    $region16: #{attflat_forward.1} parent=1 // pred_region
      %s27 = ssub.s32 16, 16
      %28 = vsyncadd [#allocation4], %s27
      %s30 = sshll.u32 [#allocation3], 4
      %s31 = int_to_ptr.vmem [resolvable:$true] %s30
      %33 = dma.hbm_to_vmem [thread:$0]  %s3, 16, %s31, [#allocation4]
    $region17: #{attflat_forward.1} parent=1 // pred_fallthru
      _
    // Predicated region
    $region18: #{attflat_forward.1} parent=1 // pred_check
      _
    $region19: #{attflat_forward.1} parent=1 // pred_check_branch
      %35 = sbr.rel (0) target = $region21
    $region20: #{attflat_forward.1} parent=1 // pred_region
      _
    $region21: #{attflat_forward.1} parent=1 // pred_fallthru
      _
    // Predicated region
    $region22: #{attflat_forward.1} parent=1 // pred_check
      _
    $region23: #{attflat_forward.1} parent=1 // pred_check_branch
      %37 = sbr.rel (0) target = $region25
    $region24: #{attflat_forward.1} parent=1 // pred_region
      _
    $region25: #{attflat_forward.1} parent=1 // pred_fallthru
      _
    // Predicated region
    $region26: #{attflat_forward.1} parent=1 // pred_check
      _
    $region27: #{attflat_forward.1} parent=1 // pred_check_branch
      %39 = sbr.rel (0) target = $region29
    $region28: #{attflat_forward.1} parent=1 // pred_region
      %s41 = ssub.s32 512, 512
      %42 = vsyncadd [#allocation7], %s41
      %s43 = sshll.u32 [#allocation6], 4
      %s44 = int_to_ptr.vmem [resolvable:$true] %s43
      %49 = dma.hbm_to_vmem [thread:$0]  %s6, 512, %s44, [#allocation7], 128, 128, 8
    $region29: #{attflat_forward.1} parent=1 // pred_fallthru
      _
    // Predicated region
    $region30: #{attflat_forward.1} parent=1 // pred_check
      _
    $region31: #{attflat_forward.1} parent=1 // pred_check_branch
      %51 = sbr.rel (0) target = $region33
    $region32: #{attflat_forward.1} parent=1 // pred_region
      %s53 = ssub.s32 16, 16
      %54 = vsyncadd [#allocation7], %s53
      %s56 = sshll.u32 [#allocation8], 4
      %s57 = int_to_ptr.vmem [resolvable:$true] %s56
      %59 = dma.hbm_to_vmem [thread:$0]  %s7, 16, %s57, [#allocation7]
    $region33: #{attflat_forward.1} parent=1 // pred_fallthru
      _
    // Predicated region
    $region34: #{attflat_forward.1} parent=1 // pred_check
      _
    $region35: #{attflat_forward.1} parent=1 // pred_check_branch
      %61 = sbr.rel (0) target = $region37
    $region36: #{attflat_forward.1} parent=1 // pred_region
      %62 = dma.done [#allocation4], 16
    $region37: #{attflat_forward.1} parent=1 // pred_fallthru
      _
    // Predicated region
    $region38: #{attflat_forward.1} parent=1 // pred_check
      _
    $region39: #{attflat_forward.1} parent=1 // pred_check_branch
      %64 = sbr.rel (0) target = $region41
    $region40: #{attflat_forward.1} parent=1 // pred_region
      %65 = dma.done [#allocation7], 512
    $region41: #{attflat_forward.1} parent=1 // pred_fallthru
      _
    // Predicated region
    $region42: #{attflat_forward.1} parent=1 // pred_check
      _
    $region43: #{attflat_forward.1} parent=1 // pred_check_branch
      %67 = sbr.rel (0) target = $region45
    $region44: #{attflat_forward.1} parent=1 // pred_region
      %68 = dma.done [#allocation7], 16
    $region45: #{attflat_forward.1} parent=1 // pred_fallthru
      _
    %v69 = vld [vmem:[%s0] sm:$0xff]
    %v70 = vld [vmem:[%s0 + $0x8] sm:$0xff]
    %v71 = vld [vmem:[%s2] sm:$0xff]
    %v72 = vld [vmem:[%s2 + $0x8] sm:$0xff]
    %v73 = vld [vmem:[%s2 + $0x10] sm:$0xff]
    %v74 = vld [vmem:[%s2 + $0x18] sm:$0xff]
    %v75 = vld [vmem:[#allocation3] sm:$0x1]
    %v77 = vlaneseq
    %v78 = vshrl.u32 %v77, 7
    %v79 = vsub.s32 0, %v78
    %v80 = vrot.slane %v75, %v79
    %vm82 = vcmask 261120
    %v84 = vsel %vm82, %v69, 0
    %v87 = vsel %vm82, %v70, 0
    %89 = vmatprep.subr.mxu0 0.0
    %90 = vmatpush1.msra.mxu0 %v71
    %91 = vmatprep.subr.mxu0 0.0
    %92 = vmatpush1.msra.mxu0 %v72
    %93 = vmatprep.subr.mxu0 0.0
    %94 = vmatpush1.msra.mxu0 %v73
    %95 = vmatprep.subr.mxu0 0.0
    %96 = vmatpush1.msra.mxu0 %v74
    %97 = vmatprep.subr.mxu0 0.0
    %98 = vmatpush1.msra.mxu0 0.0
    %99 = vmatprep.subr.mxu0 0.0
    %100 = vmatpush1.msra.mxu0 0.0
    %101 = vmatprep.subr.mxu0 0.0
    %102 = vmatpush1.msra.mxu0 0.0
    %103 = vmatprep.subr.mxu0 0.0
    %104 = vmatpush1.msra.mxu0 0.0
    %105 = vmatprep.subr.mxu0 0.0
    %106 = vmatpush1.msra.mxu0 0.0
    %107 = vmatprep.subr.mxu0 0.0
    %108 = vmatpush1.msra.mxu0 0.0
    %109 = vmatprep.subr.mxu0 0.0
    %110 = vmatpush1.msra.mxu0 0.0
    %111 = vmatprep.subr.mxu0 0.0
    %112 = vmatpush1.msra.mxu0 0.0
    %113 = vmatprep.subr.mxu0 0.0
    %114 = vmatpush1.msra.mxu0 0.0
    %115 = vmatprep.subr.mxu0 0.0
    %116 = vmatpush1.msra.mxu0 0.0
    %117 = vmatprep.subr.mxu0 0.0
    %118 = vmatpush1.msra.mxu0 0.0
    %119 = vmatprep.subr.mxu0 0.0
    %120 = vmatpush1.msra.mxu0 0.0
    %121 = vmatprep.subr.mxu0 0.0
    %122 = vmatpush1.msra.mxu0 0.0
    %123 = vmatprep.subr.mxu0 0.0
    %124 = vmatpush1.msra.mxu0 0.0
    %125 = vmatprep.subr.mxu0 0.0
    %126 = vmatpush1.msra.mxu0 0.0
    %127 = vmatprep.subr.mxu0 0.0
    %128 = vmatpush1.msra.mxu0 0.0
    %129 = vmatprep.subr.mxu0 0.0
    %130 = vmatpush1.msra.mxu0 0.0
    %131 = vmatprep.subr.mxu0 0.0
    %132 = vmatpush1.msra.mxu0 0.0
    %133 = vmatprep.subr.mxu0 0.0
    %134 = vmatpush1.msra.mxu0 0.0
    %135 = vmatprep.subr.mxu0 0.0
    %136 = vmatpush1.msra.mxu0 0.0
    %137 = vmatprep.subr.mxu0 0.0
    %138 = vmatpush1.msra.mxu0 0.0
    %139 = vmatprep.subr.mxu0 0.0
    %140 = vmatpush1.msra.mxu0 0.0
    %141 = vmatprep.subr.mxu0 0.0
    %142 = vmatpush1.msra.mxu0 0.0
    %143 = vmatprep.subr.mxu0 0.0
    %144 = vmatpush1.msra.mxu0 0.0
    %145 = vmatprep.subr.mxu0 0.0
    %146 = vmatpush1.msra.mxu0 0.0
    %147 = vmatprep.subr.mxu0 0.0
    %148 = vmatpush1.msra.mxu0 0.0
    %149 = vmatprep.subr.mxu0 0.0
    %150 = vmatpush1.msra.mxu0 0.0
    %151 = vmatprep.subr.mxu0 0.0
    %152 = vmatpush1.msra.mxu0 0.0
    %153 = vmatprep.mubr.f32.mxu0 0.0
    %154 = vmatmul.mubr.f32.gmra.mrb[0].mxu0 %v84
    %v155 = vpop.f32.mrb[0].mxu0
    %v156 = vadd.f32 %v80, %v155
    %v157 = vpop.f32.mrb[0].mxu0
    %158 = vmatprep.mubr.f32.mxu0 0.0
    %159 = vmatmul.mubr.f32.gmra.mrb[0].mxu0 %v87
    %v160 = vpop.f32.mrb[0].mxu0
    %v161 = vadd.f32 %v80, %v160
    %v162 = vpop.f32.mrb[0].mxu0
    %163 = vdwg.mxu0
    %v164 = vmax.f32 %v156, 0.0
    %v165 = vmax.f32 %v161, 0.0
    %v166 = vld [vmem:[%s4] sm:$0xff]
    %v167 = vld [vmem:[%s4 + $0x8] sm:$0xff]
    %v168 = vld [vmem:[%s4 + $0x10] sm:$0xff]
    %v169 = vld [vmem:[%s4 + $0x18] sm:$0xff]
    %v170 = vld [vmem:[#allocation2] sm:$0x1]
    %v172 = vlaneseq
    %v173 = vshrl.u32 %v172, 7
    %v174 = vsub.s32 0, %v173
    %v175 = vrot.slane %v170, %v174
    %v178 = vsel %vm82, %v164, 0
    %v181 = vsel %vm82, %v165, 0
    %183 = vmatprep.subr.mxu0 0.0
    %184 = vmatpush1.msra.mxu0 %v166
    %185 = vmatprep.subr.mxu0 0.0
    %186 = vmatpush1.msra.mxu0 %v167
    %187 = vmatprep.subr.mxu0 0.0
    %188 = vmatpush1.msra.mxu0 %v168
    %189 = vmatprep.subr.mxu0 0.0
    %190 = vmatpush1.msra.mxu0 %v169
    %191 = vmatprep.subr.mxu0 0.0
    %192 = vmatpush1.msra.mxu0 0.0
    %193 = vmatprep.subr.mxu0 0.0
    %194 = vmatpush1.msra.mxu0 0.0
    %195 = vmatprep.subr.mxu0 0.0
    %196 = vmatpush1.msra.mxu0 0.0
    %197 = vmatprep.subr.mxu0 0.0
    %198 = vmatpush1.msra.mxu0 0.0
    %199 = vmatprep.subr.mxu0 0.0
    %200 = vmatpush1.msra.mxu0 0.0
    %201 = vmatprep.subr.mxu0 0.0
    %202 = vmatpush1.msra.mxu0 0.0
    %203 = vmatprep.subr.mxu0 0.0
    %204 = vmatpush1.msra.mxu0 0.0
    %205 = vmatprep.subr.mxu0 0.0
    %206 = vmatpush1.msra.mxu0 0.0
    %207 = vmatprep.subr.mxu0 0.0
    %208 = vmatpush1.msra.mxu0 0.0
    %209 = vmatprep.subr.mxu0 0.0
    %210 = vmatpush1.msra.mxu0 0.0
    %211 = vmatprep.subr.mxu0 0.0
    %212 = vmatpush1.msra.mxu0 0.0
    %213 = vmatprep.subr.mxu0 0.0
    %214 = vmatpush1.msra.mxu0 0.0
    %215 = vmatprep.subr.mxu0 0.0
    %216 = vmatpush1.msra.mxu0 0.0
    %217 = vmatprep.subr.mxu0 0.0
    %218 = vmatpush1.msra.mxu0 0.0
    %219 = vmatprep.subr.mxu0 0.0
    %220 = vmatpush1.msra.mxu0 0.0
    %221 = vmatprep.subr.mxu0 0.0
    %222 = vmatpush1.msra.mxu0 0.0
    %223 = vmatprep.subr.mxu0 0.0
    %224 = vmatpush1.msra.mxu0 0.0
    %225 = vmatprep.subr.mxu0 0.0
    %226 = vmatpush1.msra.mxu0 0.0
    %227 = vmatprep.subr.mxu0 0.0
    %228 = vmatpush1.msra.mxu0 0.0
    %229 = vmatprep.subr.mxu0 0.0
    %230 = vmatpush1.msra.mxu0 0.0
    %231 = vmatprep.subr.mxu0 0.0
    %232 = vmatpush1.msra.mxu0 0.0
    %233 = vmatprep.subr.mxu0 0.0
    %234 = vmatpush1.msra.mxu0 0.0
    %235 = vmatprep.subr.mxu0 0.0
    %236 = vmatpush1.msra.mxu0 0.0
    %237 = vmatprep.subr.mxu0 0.0
    %238 = vmatpush1.msra.mxu0 0.0
    %239 = vmatprep.subr.mxu0 0.0
    %240 = vmatpush1.msra.mxu0 0.0
    %241 = vmatprep.subr.mxu0 0.0
    %242 = vmatpush1.msra.mxu0 0.0
    %243 = vmatprep.subr.mxu0 0.0
    %244 = vmatpush1.msra.mxu0 0.0
    %245 = vmatprep.subr.mxu0 0.0
    %246 = vmatpush1.msra.mxu0 0.0
    %247 = vmatprep.mubr.f32.mxu0 0.0
    %248 = vmatmul.mubr.f32.gmra.mrb[0].mxu0 %v178
    %v249 = vpop.f32.mrb[0].mxu0
    %v250 = vadd.f32 %v175, %v249
    %v251 = vpop.f32.mrb[0].mxu0
    %252 = vmatprep.mubr.f32.mxu0 0.0
    %253 = vmatmul.mubr.f32.gmra.mrb[0].mxu0 %v181
    %v254 = vpop.f32.mrb[0].mxu0
    %v255 = vadd.f32 %v175, %v254
    %v256 = vpop.f32.mrb[0].mxu0
    %257 = vdwg.mxu0
    %v258 = vld [vmem:[%s1] sm:$0x3]
    %v259 = vlaneseq
    %v260 = vshrl.u32 %v259, 7
    %v261 = vsub.s32 0, %v260
    %v262 = vrot.slane %v258, %v261
    %264 = vbcast.lane.b32.xlu0 %v262, 256
    %v265 = vpop.permute.xlu0 %264
    %v266 = vlaneseq
    %v267 = vshrl.u32 %v266, 7
    %v268 = vsub.s32 1, %v267
    %v269 = vrot.slane %v258, %v268
    %271 = vbcast.lane.b32.xlu0 %v269, 256
    %v272 = vpop.permute.xlu0 %271
    %vm273 = vcmp.gt.f32.partialorder %v265, 0.5
    %vm274 = vcmp.gt.f32.partialorder %v272, 0.5
    %v275 = vsel %vm273, -1e+09, %v250
    %v276 = vsel %vm274, -1e+09, %v255
    %vm277 = vcmask 7168
    %v278 = vsel %vm277, %v275, -inf
    %v279 = vrot.slane %v278, 4
    %v280 = vmax.f32 %v278, %v279
    %v281 = vrot.slane %v280, 2
    %v282 = vmax.f32 %v280, %v281
    %v283 = vrot.slane %v282, 1
    %v284 = vmax.f32 %v282, %v283
    %v285 = vsel %vm277, %v276, -inf
    %v286 = vrot.slane %v285, 4
    %v287 = vmax.f32 %v285, %v286
    %v288 = vrot.slane %v287, 2
    %v289 = vmax.f32 %v287, %v288
    %v290 = vrot.slane %v289, 1
    %v291 = vmax.f32 %v289, %v290
    %v292 = vsub.f32 %v275, %v284
    %v293 = vsub.f32 %v276, %v291
    %v294 = vmul.f32 %v292, 1.442695
    %v295 = vpow.pop %v294
    %v296 = vmul.f32 %v293, 1.442695
    %v297 = vpow.pop %v296
    %v298 = vsel %vm277, %v295, 0.0
    %v299 = vrot.slane %v298, 4
    %v300 = vadd.f32 %v298, %v299
    %v301 = vrot.slane %v300, 2
    %v302 = vadd.f32 %v300, %v301
    %v303 = vrot.slane %v302, 1
    %v304 = vadd.f32 %v302, %v303
    %v305 = vsel %vm277, %v297, 0.0
    %v306 = vrot.slane %v305, 4
    %v307 = vadd.f32 %v305, %v306
    %v308 = vrot.slane %v307, 2
    %v309 = vadd.f32 %v307, %v308
    %v310 = vrot.slane %v309, 1
    %v311 = vadd.f32 %v309, %v310
    %v312 = vrcp.pop %v304
    %v313 = vrcp.pop %v311
    %v314 = vmul.f32 %v295, %v312
    %v315 = vmul.f32 %v297, %v313
    %316 = vxpose.xlu0.b32.start [1/16] %v314, 128
    %317 = vxpose.xlu0.b32.cont [2/16] 0.0, 128
    %318 = vxpose.xlu0.b32.cont [3/16] 0.0, 128
    %319 = vxpose.xlu0.b32.cont [4/16] 0.0, 128
    %320 = vxpose.xlu0.b32.cont [5/16] 0.0, 128
    %321 = vxpose.xlu0.b32.cont [6/16] 0.0, 128
    %322 = vxpose.xlu0.b32.cont [7/16] 0.0, 128
    %323 = vxpose.xlu0.b32.cont [8/16] 0.0, 128
    %324 = vxpose.xlu0.b32.cont [9/16] 0.0, 128
    %325 = vxpose.xlu0.b32.cont [10/16] 0.0, 128
    %326 = vxpose.xlu0.b32.cont [11/16] 0.0, 128
    %327 = vxpose.xlu0.b32.cont [12/16] 0.0, 128
    %328 = vxpose.xlu0.b32.cont [13/16] 0.0, 128
    %329 = vxpose.xlu0.b32.cont [14/16] 0.0, 128
    %330 = vxpose.xlu0.b32.cont [15/16] 0.0, 128
    %331 = vxpose.xlu0.b32.end [16/16] 0.0, 128
    %v332 = vpop.trf.xlu0
    %v333 = vpop.trf.xlu0
    %v334 = vpop.trf.xlu0
    %v335 = vpop.trf.xlu0
    %v336 = vpop.trf.xlu0
    %v337 = vpop.trf.xlu0
    %v338 = vpop.trf.xlu0
    %v339 = vpop.trf.xlu0
    %v340 = vpop.trf.xlu0
    %v341 = vpop.trf.xlu0
    %v342 = vpop.trf.xlu0
    %v343 = vpop.trf.xlu0
    %v344 = vpop.trf.xlu0
    %v345 = vpop.trf.xlu0
    %v346 = vpop.trf.xlu0
    %v347 = vpop.trf.xlu0
    %vm348 = vcmask 64512
    %v350 = vsel %vm348, %v332, 0
    %352 = vmatprep.subr.mxu0 0.0
    %353 = vmatpush1.msra.mxu0 %v69
    %354 = vmatprep.subr.mxu0 0.0
    %355 = vmatpush1.msra.mxu0 0.0
    %356 = vmatprep.subr.mxu0 0.0
    %357 = vmatpush1.msra.mxu0 0.0
    %358 = vmatprep.subr.mxu0 0.0
    %359 = vmatpush1.msra.mxu0 0.0
    %360 = vmatprep.subr.mxu0 0.0
    %361 = vmatpush1.msra.mxu0 0.0
    %362 = vmatprep.subr.mxu0 0.0
    %363 = vmatpush1.msra.mxu0 0.0
    %364 = vmatprep.subr.mxu0 0.0
    %365 = vmatpush1.msra.mxu0 0.0
    %366 = vmatprep.subr.mxu0 0.0
    %367 = vmatpush1.msra.mxu0 0.0
    %368 = vmatprep.subr.mxu0 0.0
    %369 = vmatpush1.msra.mxu0 0.0
    %370 = vmatprep.subr.mxu0 0.0
    %371 = vmatpush1.msra.mxu0 0.0
    %372 = vmatprep.subr.mxu0 0.0
    %373 = vmatpush1.msra.mxu0 0.0
    %374 = vmatprep.subr.mxu0 0.0
    %375 = vmatpush1.msra.mxu0 0.0
    %376 = vmatprep.subr.mxu0 0.0
    %377 = vmatpush1.msra.mxu0 0.0
    %378 = vmatprep.subr.mxu0 0.0
    %379 = vmatpush1.msra.mxu0 0.0
    %380 = vmatprep.subr.mxu0 0.0
    %381 = vmatpush1.msra.mxu0 0.0
    %382 = vmatprep.subr.mxu0 0.0
    %383 = vmatpush1.msra.mxu0 0.0
    %384 = vmatprep.subr.mxu0 0.0
    %385 = vmatpush1.msra.mxu0 0.0
    %386 = vmatprep.subr.mxu0 0.0
    %387 = vmatpush1.msra.mxu0 0.0
    %388 = vmatprep.subr.mxu0 0.0
    %389 = vmatpush1.msra.mxu0 0.0
    %390 = vmatprep.subr.mxu0 0.0
    %391 = vmatpush1.msra.mxu0 0.0
    %392 = vmatprep.subr.mxu0 0.0
    %393 = vmatpush1.msra.mxu0 0.0
    %394 = vmatprep.subr.mxu0 0.0
    %395 = vmatpush1.msra.mxu0 0.0
    %396 = vmatprep.subr.mxu0 0.0
    %397 = vmatpush1.msra.mxu0 0.0
    %398 = vmatprep.subr.mxu0 0.0
    %399 = vmatpush1.msra.mxu0 0.0
    %400 = vmatprep.subr.mxu0 0.0
    %401 = vmatpush1.msra.mxu0 0.0
    %402 = vmatprep.subr.mxu0 0.0
    %403 = vmatpush1.msra.mxu0 0.0
    %404 = vmatprep.subr.mxu0 0.0
    %405 = vmatpush1.msra.mxu0 0.0
    %406 = vmatprep.subr.mxu0 0.0
    %407 = vmatpush1.msra.mxu0 0.0
    %408 = vmatprep.subr.mxu0 0.0
    %409 = vmatpush1.msra.mxu0 0.0
    %410 = vmatprep.subr.mxu0 0.0
    %411 = vmatpush1.msra.mxu0 0.0
    %412 = vmatprep.subr.mxu0 0.0
    %413 = vmatpush1.msra.mxu0 0.0
    %414 = vmatprep.subr.mxu0 0.0
    %415 = vmatpush1.msra.mxu0 0.0
    %416 = vmatprep.mubr.f32.mxu0 0.0
    %417 = vmatmul.mubr.f32.gmra.mrb[0].mxu0 %v350
    %v418 = vpop.f32.mrb[0].mxu0
    %v419 = vadd.f32 0.0, %v418
    %v420 = vpop.f32.mrb[0].mxu0
    %421 = vdwg.mxu0
    %422 = vxpose.xlu0.b32.start [1/16] %v315, 128
    %423 = vxpose.xlu0.b32.cont [2/16] 0.0, 128
    %424 = vxpose.xlu0.b32.cont [3/16] 0.0, 128
    %425 = vxpose.xlu0.b32.cont [4/16] 0.0, 128
    %426 = vxpose.xlu0.b32.cont [5/16] 0.0, 128
    %427 = vxpose.xlu0.b32.cont [6/16] 0.0, 128
    %428 = vxpose.xlu0.b32.cont [7/16] 0.0, 128
    %429 = vxpose.xlu0.b32.cont [8/16] 0.0, 128
    %430 = vxpose.xlu0.b32.cont [9/16] 0.0, 128
    %431 = vxpose.xlu0.b32.cont [10/16] 0.0, 128
    %432 = vxpose.xlu0.b32.cont [11/16] 0.0, 128
    %433 = vxpose.xlu0.b32.cont [12/16] 0.0, 128
    %434 = vxpose.xlu0.b32.cont [13/16] 0.0, 128
    %435 = vxpose.xlu0.b32.cont [14/16] 0.0, 128
    %436 = vxpose.xlu0.b32.cont [15/16] 0.0, 128
    %437 = vxpose.xlu0.b32.end [16/16] 0.0, 128
    %v438 = vpop.trf.xlu0
    %v439 = vpop.trf.xlu0
    %v440 = vpop.trf.xlu0
    %v441 = vpop.trf.xlu0
    %v442 = vpop.trf.xlu0
    %v443 = vpop.trf.xlu0
    %v444 = vpop.trf.xlu0
    %v445 = vpop.trf.xlu0
    %v446 = vpop.trf.xlu0
    %v447 = vpop.trf.xlu0
    %v448 = vpop.trf.xlu0
    %v449 = vpop.trf.xlu0
    %v450 = vpop.trf.xlu0
    %v451 = vpop.trf.xlu0
    %v452 = vpop.trf.xlu0
    %v453 = vpop.trf.xlu0
    %v455 = vsel %vm348, %v438, 0
    %457 = vmatprep.subr.mxu0 0.0
    %458 = vmatpush1.msra.mxu0 %v70
    %459 = vmatprep.subr.mxu0 0.0
    %460 = vmatpush1.msra.mxu0 0.0
    %461 = vmatprep.subr.mxu0 0.0
    %462 = vmatpush1.msra.mxu0 0.0
    %463 = vmatprep.subr.mxu0 0.0
    %464 = vmatpush1.msra.mxu0 0.0
    %465 = vmatprep.subr.mxu0 0.0
    %466 = vmatpush1.msra.mxu0 0.0
    %467 = vmatprep.subr.mxu0 0.0
    %468 = vmatpush1.msra.mxu0 0.0
    %469 = vmatprep.subr.mxu0 0.0
    %470 = vmatpush1.msra.mxu0 0.0
    %471 = vmatprep.subr.mxu0 0.0
    %472 = vmatpush1.msra.mxu0 0.0
    %473 = vmatprep.subr.mxu0 0.0
    %474 = vmatpush1.msra.mxu0 0.0
    %475 = vmatprep.subr.mxu0 0.0
    %476 = vmatpush1.msra.mxu0 0.0
    %477 = vmatprep.subr.mxu0 0.0
    %478 = vmatpush1.msra.mxu0 0.0
    %479 = vmatprep.subr.mxu0 0.0
    %480 = vmatpush1.msra.mxu0 0.0
    %481 = vmatprep.subr.mxu0 0.0
    %482 = vmatpush1.msra.mxu0 0.0
    %483 = vmatprep.subr.mxu0 0.0
    %484 = vmatpush1.msra.mxu0 0.0
    %485 = vmatprep.subr.mxu0 0.0
    %486 = vmatpush1.msra.mxu0 0.0
    %487 = vmatprep.subr.mxu0 0.0
    %488 = vmatpush1.msra.mxu0 0.0
    %489 = vmatprep.subr.mxu0 0.0
    %490 = vmatpush1.msra.mxu0 0.0
    %491 = vmatprep.subr.mxu0 0.0
    %492 = vmatpush1.msra.mxu0 0.0
    %493 = vmatprep.subr.mxu0 0.0
    %494 = vmatpush1.msra.mxu0 0.0
    %495 = vmatprep.subr.mxu0 0.0
    %496 = vmatpush1.msra.mxu0 0.0
    %497 = vmatprep.subr.mxu0 0.0
    %498 = vmatpush1.msra.mxu0 0.0
    %499 = vmatprep.subr.mxu0 0.0
    %500 = vmatpush1.msra.mxu0 0.0
    %501 = vmatprep.subr.mxu0 0.0
    %502 = vmatpush1.msra.mxu0 0.0
    %503 = vmatprep.subr.mxu0 0.0
    %504 = vmatpush1.msra.mxu0 0.0
    %505 = vmatprep.subr.mxu0 0.0
    %506 = vmatpush1.msra.mxu0 0.0
    %507 = vmatprep.subr.mxu0 0.0
    %508 = vmatpush1.msra.mxu0 0.0
    %509 = vmatprep.subr.mxu0 0.0
    %510 = vmatpush1.msra.mxu0 0.0
    %511 = vmatprep.subr.mxu0 0.0
    %512 = vmatpush1.msra.mxu0 0.0
    %513 = vmatprep.subr.mxu0 0.0
    %514 = vmatpush1.msra.mxu0 0.0
    %515 = vmatprep.subr.mxu0 0.0
    %516 = vmatpush1.msra.mxu0 0.0
    %517 = vmatprep.subr.mxu0 0.0
    %518 = vmatpush1.msra.mxu0 0.0
    %519 = vmatprep.subr.mxu0 0.0
    %520 = vmatpush1.msra.mxu0 0.0
    %521 = vmatprep.mubr.f32.mxu0 0.0
    %522 = vmatmul.mubr.f32.gmra.mrb[0].mxu0 %v455
    %v523 = vpop.f32.mrb[0].mxu0
    %v524 = vadd.f32 0.0, %v523
    %v525 = vpop.f32.mrb[0].mxu0
    %526 = vdwg.mxu0
    %v527 = vld [vmem:[#allocation6] sm:$0xff]
    %v528 = vld [vmem:[#allocation6 + $0x8] sm:$0xff]
    %v529 = vld [vmem:[#allocation6 + $0x10] sm:$0xff]
    %v530 = vld [vmem:[#allocation6 + $0x18] sm:$0xff]
    %v531 = vld [vmem:[#allocation8] sm:$0x1]
    %v533 = vlaneseq
    %v534 = vshrl.u32 %v533, 7
    %v535 = vsub.s32 0, %v534
    %v536 = vrot.slane %v531, %v535
    %v540 = vrot.slane %v524, 7
    %vm541 = vcmask 1041409
    %v542 = vsel %vm541, %v540, %v419
    %v543 = vsel %vm82, %v542, 0
    %545 = vmatprep.subr.mxu0 0.0
    %546 = vmatpush1.msra.mxu0 %v527
    %547 = vmatprep.subr.mxu0 0.0
    %548 = vmatpush1.msra.mxu0 %v528
    %549 = vmatprep.subr.mxu0 0.0
    %550 = vmatpush1.msra.mxu0 %v529
    %551 = vmatprep.subr.mxu0 0.0
    %552 = vmatpush1.msra.mxu0 %v530
    %553 = vmatprep.subr.mxu0 0.0
    %554 = vmatpush1.msra.mxu0 0.0
    %555 = vmatprep.subr.mxu0 0.0
    %556 = vmatpush1.msra.mxu0 0.0
    %557 = vmatprep.subr.mxu0 0.0
    %558 = vmatpush1.msra.mxu0 0.0
    %559 = vmatprep.subr.mxu0 0.0
    %560 = vmatpush1.msra.mxu0 0.0
    %561 = vmatprep.subr.mxu0 0.0
    %562 = vmatpush1.msra.mxu0 0.0
    %563 = vmatprep.subr.mxu0 0.0
    %564 = vmatpush1.msra.mxu0 0.0
    %565 = vmatprep.subr.mxu0 0.0
    %566 = vmatpush1.msra.mxu0 0.0
    %567 = vmatprep.subr.mxu0 0.0
    %568 = vmatpush1.msra.mxu0 0.0
    %569 = vmatprep.subr.mxu0 0.0
    %570 = vmatpush1.msra.mxu0 0.0
    %571 = vmatprep.subr.mxu0 0.0
    %572 = vmatpush1.msra.mxu0 0.0
    %573 = vmatprep.subr.mxu0 0.0
    %574 = vmatpush1.msra.mxu0 0.0
    %575 = vmatprep.subr.mxu0 0.0
    %576 = vmatpush1.msra.mxu0 0.0
    %577 = vmatprep.subr.mxu0 0.0
    %578 = vmatpush1.msra.mxu0 0.0
    %579 = vmatprep.subr.mxu0 0.0
    %580 = vmatpush1.msra.mxu0 0.0
    %581 = vmatprep.subr.mxu0 0.0
    %582 = vmatpush1.msra.mxu0 0.0
    %583 = vmatprep.subr.mxu0 0.0
    %584 = vmatpush1.msra.mxu0 0.0
    %585 = vmatprep.subr.mxu0 0.0
    %586 = vmatpush1.msra.mxu0 0.0
    %587 = vmatprep.subr.mxu0 0.0
    %588 = vmatpush1.msra.mxu0 0.0
    %589 = vmatprep.subr.mxu0 0.0
    %590 = vmatpush1.msra.mxu0 0.0
    %591 = vmatprep.subr.mxu0 0.0
    %592 = vmatpush1.msra.mxu0 0.0
    %593 = vmatprep.subr.mxu0 0.0
    %594 = vmatpush1.msra.mxu0 0.0
    %595 = vmatprep.subr.mxu0 0.0
    %596 = vmatpush1.msra.mxu0 0.0
    %597 = vmatprep.subr.mxu0 0.0
    %598 = vmatpush1.msra.mxu0 0.0
    %599 = vmatprep.subr.mxu0 0.0
    %600 = vmatpush1.msra.mxu0 0.0
    %601 = vmatprep.subr.mxu0 0.0
    %602 = vmatpush1.msra.mxu0 0.0
    %603 = vmatprep.subr.mxu0 0.0
    %604 = vmatpush1.msra.mxu0 0.0
    %605 = vmatprep.subr.mxu0 0.0
    %606 = vmatpush1.msra.mxu0 0.0
    %607 = vmatprep.subr.mxu0 0.0
    %608 = vmatpush1.msra.mxu0 0.0
    %609 = vmatprep.mubr.f32.mxu0 0.0
    %610 = vmatmul.mubr.f32.gmra.mrb[0].mxu0 %v543
    %v611 = vpop.f32.mrb[0].mxu0
    %v612 = vadd.f32 %v536, %v611
    %v613 = vpop.f32.mrb[0].mxu0
    %614 = vdwg.mxu0
    %vm615 = vcmask 517120
    %616 = vst.msk [vmem:[#allocation9] sm:$0x3] %vm615, %v612
    // Predicated region
    $region46: #{attflat_forward.1} parent=1 // pred_check
      _
    $region47: #{attflat_forward.1} parent=1 // pred_check_branch
      %618 = sbr.rel (0) target = $region49
    $region48: #{attflat_forward.1} parent=1 // pred_region
      %s620 = ssub.s32 32, 32
      %621 = vsyncadd [#allocation5], %s620
      %s623 = sshll.u32 [#allocation9], 4
      %s624 = int_to_ptr.vmem [resolvable:$true] %s623
      %626 = dma.vmem_to_hbm [thread:$0]  %s624, 32, %s8, [#allocation5]
    $region49: #{attflat_forward.1} parent=1 // pred_fallthru
      _
    // Predicated region
    $region50: #{attflat_forward.1} parent=1 // pred_check
      _
    $region51: #{attflat_forward.1} parent=1 // pred_check_branch
      %628 = sbr.rel (0) target = $region53
    $region52: #{attflat_forward.1} parent=1 // pred_region
      %629 = dma.done [#allocation5], 32
    $region53: #{attflat_forward.1} parent=1 // pred_fallthru
      _
    %630 = vsyncpa [#allocation4], 1
    %631 = vsyncpa [#allocation7], 1
    %632 = vsyncpa [#allocation5], 1

</llo_original>
